<compile_context>
chip_gen: v7x
topology: tpu7x:2x2x1
jax: 0.10.0
libtpu: 0.0.40
codegen_flags: <defaults>
</compile_context>

<pallas_src>
import math

import jax
import jax.numpy as jnp
from jax import lax
from jax.experimental import pallas as pl
from jax.experimental.pallas import tpu as pltpu


# ---------------------------------------------------------------------------
# Hardware-aware knobs.
# ---------------------------------------------------------------------------
def _tpu_params():
    """Returns (mxu_quantum, vmem_capacity_bytes) with conservative fallbacks.

    MXU K/N quantum: 128 on <= v5 chips (4x128^2 MXUs), 256 on v6e/v7x (2x256^2).
    """
    quantum, vmem_cap = 256, 64 << 20          # v7x-safe defaults
    gen = None
    try:
        info = pltpu.get_tpu_info()
        vmem_cap = int(getattr(info, "vmem_capacity_bytes", vmem_cap))
        name = str(getattr(info, "chip_version", "")).lower()
        for g in range(2, 10):
            if f"v{g}" in name:
                gen = g
                break
    except Exception:
        pass
    if gen is None:
        try:
            import re
            kind = jax.devices()[0].device_kind.lower()
            m = re.search(r"v(\d+)", kind)
            if m is not None:
                gen = int(m.group(1))
        except Exception:
            pass
    if gen is not None and gen <= 5:
        quantum = 128
    return quantum, vmem_cap


def _pick_fold(W, C_in, rd, r, quantum, max_weight_bytes=2 << 20):
    """Smallest pixel-fold p (divisor of W) that makes the kernel lane dense.

    Folding p pixels per matmul row is only worth it while it fills otherwise
    padded MXU lanes.  Cost per input pixel ~ ceil(p*C_in/q) * ceil(r*p*rd/q) / p
    (padded K-passes x N-passes).  We prefer (p*rd) % 128 == 0 (unmasked
    full-lane stores), minimize the pass cost, and break ties with the smallest
    p (block-diagonal weight bytes grow ~ p^2).
    """
    divs = [d for d in range(1, W + 1) if W % d == 0]
    lane_ok = [p for p in divs if (p * rd) % 128 == 0]
    pool = lane_ok if lane_ok else divs
    small = [p for p in pool if (p * C_in) * (r * p * rd) * 2 <= max_weight_bytes]
    if small:
        pool = small

    def mxu_cost(p):
        return math.ceil(p * C_in / quantum) * math.ceil(r * p * rd / quantum) / p

    return min(pool, key=lambda p: (mxu_cost(p), p))


def _pick_rows(B, H, wp, r, x_row_bytes, o_row_bytes, *, min_steps=8,
               tile_budget=12 << 20):
    """Image rows per grid step.

    Largest divisor th of H whose blocks are (8,128)-legal and whose
    double-buffered x/out tiles fit tile_budget, while still leaving
    >= min_steps grid steps (two v7x TensorCores + pipeline overlap).  If
    min_steps is unattainable, maximize the number of steps instead.
    """
    divs = [d for d in range(1, H + 1) if H % d == 0]

    def aligned(th):
        return th == H or ((th * r) % 8 == 0 and (th * wp) % 8 == 0)

    def tile_bytes(th):
        return 2 * th * (x_row_bytes + o_row_bytes)

    cands = [th for th in divs if aligned(th) and tile_bytes(th) <= tile_budget]
    if not cands:
        al = [th for th in divs if aligned(th)]
        cands = [min(al)] if al else [H]

    steps = lambda th: B * (H // th)
    good = [th for th in cands if steps(th) >= min_steps]
    if good:
        return max(good)
    return min(cands)


def _pick_slab(th, wp, r, prd, acc_budget=128 << 10):
    """Image rows per in-kernel slab: keep the live f32 accumulator (+retile)
    around <= 32 vregs so the epilogue does not spill; prefer 8-aligned slabs."""
    if th * wp * r * prd * 4 <= acc_budget:
        return th
    aligned, fallback = None, None
    for tc in range(1, th):
        if th % tc:
            continue
        if tc * wp * r * prd * 4 > acc_budget:
            continue
        fallback = tc
        if (tc * r) % 8 == 0 and (tc * wp) % 8 == 0:
            aligned = tc
    return aligned or fallback or 1


# ---------------------------------------------------------------------------
# Kernel.
# ---------------------------------------------------------------------------
def _make_kernel(th, tc, wp, r, prd, cast_input):
    n_slabs = th // tc
    rows_x = tc * wp            # matmul rows per slab
    rows_o = tc * r             # upsampled output rows per slab
    lanes = wp * prd            # output row width (== W * r * dim_out)
    x_aligned = rows_x % 8 == 0
    o_aligned = rows_o % 8 == 0

    def run_slab(x_ref, w_ref, b_ref, o_ref, s):
        x0 = s * rows_x
        o0 = s * rows_o
        if not isinstance(s, int):
            if x_aligned:
                x0 = pl.multiple_of(x0, 8)
            if o_aligned:
                o0 = pl.multiple_of(o0, 8)
        xs = x_ref[0, pl.ds(x0, rows_x), :]
        if cast_input:
            xs = xs.astype(jnp.bfloat16)          # cast on VPU, DMA'd bytes unchanged
        acc = jnp.dot(xs, w_ref[...], preferred_element_type=jnp.float32)
        y = acc + b_ref[...]                      # (rows_x, r*prd) f32
        # Retile (t, g, rh, :) -> (t, rh, g, :): one XLU/relayout pass instead of
        # rows_x * r masked single-row stores, then one dense full-lane store.
        y = y.reshape(tc, wp, r, prd)
        y = jnp.swapaxes(y, 1, 2)
        y = y.reshape(rows_o, lanes).astype(o_ref.dtype)
        o_ref[0, pl.ds(o0, rows_o), :] = y

    def kernel(x_ref, w_ref, b_ref, o_ref):
        # x_ref: (1, th*wp, p*C_in)   folded activation rows (input dtype)
        # w_ref: (p*C_in, r*prd)      bf16 block-diagonal, shuffle-ordered weight
        # b_ref: (1, r*prd)           f32 shuffle-ordered bias
        # o_ref: (1, th*r, W*rd)      rows of the final upsampled image
        if n_slabs == 1:
            run_slab(x_ref, w_ref, b_ref, o_ref, 0)
        else:
            def body(s, carry):
                run_slab(x_ref, w_ref, b_ref, o_ref, s)
                return carry
            lax.fori_loop(0, n_slabs, body, 0, unroll=min(n_slabs, 8))

    return kernel


# ---------------------------------------------------------------------------
# Wrapper.
# ---------------------------------------------------------------------------
def pixel_shuffle_upsample(x, weight, bias, *, ratio=2, out_dtype=None):
    """Fused nn.Linear(dim_in, dim_out*ratio^2) + pixel shuffle.

    x:      (B, H, W, C_in)   NHWC activations (f32 or bf16)
    weight: (N, C_in)         nn.Linear weight, N = dim_out * ratio**2
    bias:   (N,)
    returns (B, H*ratio, W*ratio, dim_out) in `out_dtype` (default: x.dtype).
    """
    B, H, W, C_in = x.shape
    r = int(ratio)
    N = weight.shape[0]
    dim_out = N // (r * r)
    assert dim_out * r * r == N and weight.shape[1] == C_in
    rd = r * dim_out
    out_dtype = jnp.dtype(x.dtype if out_dtype is None else out_dtype)

    quantum, vmem_cap = _tpu_params()
    p = _pick_fold(W, C_in, rd, r, quantum)
    wp = W // p
    prd = p * rd

    # Folded activation view (free, contiguous).  NOTE: no wrapper-side dtype
    # cast -- f32 inputs are DMA'd once as f32 and cast to bf16 on the VPU
    # inside the kernel (8 B/elem -> 4 B/elem of HBM traffic for f32 inputs).
    x3 = x.reshape(B, H * wp, p * C_in)
    cast_input = x3.dtype != jnp.bfloat16

    # Block-diagonal, shuffle-ordered weight (built once; tiny after the fold fix).
    #   bd[i*C_in + k, rh*prd + j*rd + m] = weight[rh*rd + m, k] if i == j else 0
    # so matmul row (h, g) already holds, for every rh, the lane segment that lands
    # in output row h*r + rh at lane offset g*prd.
    wt_r = weight.astype(jnp.float32).T.reshape(C_in, r, rd)
    eye_p = jnp.eye(p, dtype=jnp.float32)
    bd = jnp.einsum("ij,krd->ikrjd", eye_p, wt_r)          # (p, C_in, r, p, rd)
    bd = bd.reshape(p * C_in, r * prd).astype(jnp.bfloat16)
    b_bd = jnp.broadcast_to(
        bias.astype(jnp.float32).reshape(r, 1, rd), (r, p, rd)).reshape(1, r * prd)

    x_row_bytes = wp * p * C_in * jnp.dtype(x3.dtype).itemsize   # per image row
    o_row_bytes = r * W * rd * out_dtype.itemsize
    th = _pick_rows(B, H, wp, r, x_row_bytes, o_row_bytes)
    tc = _pick_slab(th, wp, r, prd)

    # Real VMEM budget: double-buffered x/out tiles + (default double-buffered)
    # resident weight & bias, 25% headroom, capped against v7x's 64 MiB/TC.
    x_tile = th * x_row_bytes
    o_tile = th * o_row_bytes
    w_bytes = bd.size * 2
    b_bytes = b_bd.size * 4
    est = 2 * (x_tile + o_tile) + 2 * (w_bytes + b_bytes)
    cap = min(40 << 20, int(vmem_cap * 0.6))
    vmem_limit = int(est * 1.25) + (2 << 20)
    vmem_limit = max(min(max(vmem_limit, 8 << 20), cap), est + (1 << 20))

    # TRUE (un-folded) flops / bytes for XLA's scheduler.
    flops = 2 * B * H * W * C_in * N
    bytes_accessed = (x3.size * jnp.dtype(x3.dtype).itemsize + w_bytes + b_bytes
                      + B * H * r * W * rd * out_dtype.itemsize)

    kernel = _make_kernel(th, tc, wp, r, prd, cast_input)

    out3 = pl.pallas_call(
        kernel,
        out_shape=jax.ShapeDtypeStruct((B, H * r, W * rd), out_dtype),
        grid_spec=pltpu.PrefetchScalarGridSpec(
            num_scalar_prefetch=0,
            grid=(B, H // th),
            in_specs=[
                pl.BlockSpec((1, th * wp, p * C_in), lambda b, hb: (b, hb, 0)),
                pl.BlockSpec((p * C_in, r * prd), lambda b, hb: (0, 0)),
                pl.BlockSpec((1, r * prd), lambda b, hb: (0, 0)),
            ],
            out_specs=pl.BlockSpec((1, th * r, W * rd), lambda b, hb: (b, hb, 0)),
        ),
        compiler_params=pltpu.CompilerParams(
            dimension_semantics=("parallel", "parallel"),
            vmem_limit_bytes=int(vmem_limit)),
        cost_estimate=pl.CostEstimate(
            flops=int(flops), transcendentals=0, bytes_accessed=int(bytes_accessed)),
    )(x3, bd, b_bd)

    # Free contiguous reinterpretation to the module's NHWC output layout.
    return out3.reshape(B, H * r, W * r, dim_out)


# ---------------------------------------------------------------------------
# Pure-JAX reference (same numerics: bf16 operands, f32 accumulation).
# ---------------------------------------------------------------------------
def _reference(x, weight, bias, ratio):
    B, H, W, _ = x.shape
    r = ratio
    dim_out = weight.shape[0] // (r * r)
    xb = x.astype(jnp.bfloat16).astype(jnp.float32)
    wb = weight.astype(jnp.bfloat16).astype(jnp.float32)
    z = jnp.einsum("bhwk,nk->bhwn", xb, wb, precision=lax.Precision.HIGHEST)
    z = z + bias.astype(jnp.float32)
    z = z.reshape(B, H, W, r, r, dim_out)
    z = jnp.transpose(z, (0, 1, 3, 2, 4, 5))       # == torch transpose(2, 3)
    return z.reshape(B, H * r, W * r, dim_out)


if __name__ == "__main__":
    keys = jax.random.split(jax.random.PRNGKey(0), 6)

    # Config 1: f32 in / f32 out, tiny channels -> exercises the pixel-fold path (p>1).
    B, H, W, dim_in, dim_out, ratio = 2, 8, 8, 32, 16, 2
    N = dim_out * ratio * ratio
    bound = 1.0 / math.sqrt(dim_in)
    x1 = jax.random.normal(keys[0], (B, H, W, dim_in), dtype=jnp.float32)
    w1 = jax.random.uniform(keys[1], (N, dim_in), minval=-bound, maxval=bound,
                            dtype=jnp.float32)
    b1 = jax.random.uniform(keys[2], (N,), minval=-bound, maxval=bound,
                            dtype=jnp.float32)

    out1 = jax.block_until_ready(pixel_shuffle_upsample(x1, w1, b1, ratio=ratio))
    ref1 = _reference(x1, w1, b1, ratio)
    assert out1.shape == (B, H * ratio, W * ratio, dim_out), out1.shape
    assert out1.dtype == x1.dtype
    err1 = float(jnp.max(jnp.abs(out1.astype(jnp.float32) - ref1)))
    assert jnp.allclose(out1.astype(jnp.float32), ref1, atol=2e-3, rtol=2e-3), err1

    # Config 2: bf16 in / bf16 out, p == 1 path, multiple in-kernel slabs
    # (exercises the fori_loop epilogue and the no-input-cast path).
    B, H, W, dim_in, dim_out, ratio = 2, 32, 32, 32, 64, 2
    N = dim_out * ratio * ratio
    bound = 1.0 / math.sqrt(dim_in)
    x2 = jax.random.normal(keys[3], (B, H, W, dim_in),
                           dtype=jnp.float32).astype(jnp.bfloat16)
    w2 = jax.random.uniform(keys[4], (N, dim_in), minval=-bound, maxval=bound,
                            dtype=jnp.float32)
    b2 = jax.random.uniform(keys[5], (N,), minval=-bound, maxval=bound,
                            dtype=jnp.float32)

    out2 = jax.block_until_ready(
        pixel_shuffle_upsample(x2, w2, b2, ratio=ratio, out_dtype=jnp.bfloat16))
    ref2 = _reference(x2, w2, b2, ratio)
    assert out2.shape == (B, H * ratio, W * ratio, dim_out), out2.shape
    assert out2.dtype == jnp.bfloat16
    err2 = float(jnp.max(jnp.abs(out2.astype(jnp.float32) - ref2)))
    assert jnp.allclose(out2.astype(jnp.float32), ref2, atol=2e-2, rtol=2e-2), err2

    print("KERNEL_OK")
</pallas_src>

<mosaic_0001>
module attributes {stable_mosaic.version = 11 : i64} {
  func.func @kernel(%arg0: i32, %arg1: i32, %arg2: memref<1x8x128xf32, #tpu.memory_space<vmem>>, %arg3: memref<128x256xbf16, #tpu.memory_space<vmem>>, %arg4: memref<1x256xf32, #tpu.memory_space<vmem>>, %arg5: memref<1x8x256xf32, #tpu.memory_space<vmem>>) attributes {dimension_semantics = [#tpu.dimension_semantics<parallel>, #tpu.dimension_semantics<parallel>], iteration_bounds = array<i64: 2, 2>, scalar_prefetch = 0 : i64, scratch_operands = 0 : i64, tpu.core_type = #tpu.core_type<tc>, window_params = [{transform_indices = @transform_0, window_bounds = array<i64: 1, 8, 128>}, {pipeline_mode = #tpu.pipeline_mode<synchronous>, transform_indices = @transform_1, window_bounds = array<i64: 128, 256>}, {pipeline_mode = #tpu.pipeline_mode<synchronous>, transform_indices = @transform_2, window_bounds = array<i64: 1, 256>}, {transform_indices = @transform_3, window_bounds = array<i64: 1, 8, 256>}]} {
    %c0 = arith.constant 0 : index
    %c0_0 = arith.constant 0 : index
    %c0_1 = arith.constant 0 : index
    %0 = vector.load %arg2[%c0, %c0_0, %c0_1] : memref<1x8x128xf32, #tpu.memory_space<vmem>>, vector<1x8x128xf32>
    %1 = vector.shape_cast %0 : vector<1x8x128xf32> to vector<8x128xf32>
    %2 = arith.truncf %1 : vector<8x128xf32> to vector<8x128xbf16>
    %c0_2 = arith.constant 0 : index
    %c0_3 = arith.constant 0 : index
    %3 = vector.load %arg3[%c0_2, %c0_3] : memref<128x256xbf16, #tpu.memory_space<vmem>>, vector<128x256xbf16>
    %cst = arith.constant dense<0.000000e+00> : vector<8x256xf32>
    %4 = tpu.matmul %2, %3, %cst {dimension_numbers = #tpu.dot_dimension_numbers<[1], [0], [0], [1], [0, 0, 1, 1], [], []>} : vector<8x128xbf16>, vector<128x256xbf16>, vector<8x256xf32> -> vector<8x256xf32>
    %c0_4 = arith.constant 0 : index
    %c0_5 = arith.constant 0 : index
    %5 = vector.load %arg4[%c0_4, %c0_5] : memref<1x256xf32, #tpu.memory_space<vmem>>, vector<1x256xf32>
    %6 = vector.broadcast %5 : vector<1x256xf32> to vector<8x256xf32>
    %7 = arith.addf %4, %6 : vector<8x256xf32>
    %8 = vector.shape_cast %7 : vector<8x256xf32> to vector<4x2x2x128xf32>
    %9 = tpu.transpose %8, [0, 2, 1, 3] : vector<4x2x2x128xf32> -> vector<4x2x2x128xf32>
    %10 = vector.shape_cast %9 : vector<4x2x2x128xf32> to vector<8x256xf32>
    %c0_6 = arith.constant 0 : index
    %c0_7 = arith.constant 0 : index
    %c0_8 = arith.constant 0 : index
    %11 = vector.load %arg5[%c0_6, %c0_7, %c0_8] : memref<1x8x256xf32, #tpu.memory_space<vmem>>, vector<1x8x256xf32>
    %12 = vector.shape_cast %11 : vector<1x8x256xf32> to vector<8x256xf32>
    %13 = vector.shape_cast %10 : vector<8x256xf32> to vector<1x8x256xf32>
    tpu.vector_store %arg5[%c0_6, %c0_7, %c0_8], %13 {strides = array<i32>} : memref<1x8x256xf32, #tpu.memory_space<vmem>>, vector<1x8x256xf32>,
    return
  }
  func.func @transform_0(%arg0: i32, %arg1: i32) -> (i32, i32, i32) {
    %c0_i32 = arith.constant 0 : i32
    %c0_i32_0 = arith.constant 0 : i32
    return %arg0, %arg1, %c0_i32 : i32, i32, i32
  }
  func.func @transform_1(%arg0: i32, %arg1: i32) -> (i32, i32) {
    %c0_i32 = arith.constant 0 : i32
    %c0_i32_0 = arith.constant 0 : i32
    %c0_i32_1 = arith.constant 0 : i32
    return %c0_i32, %c0_i32_0 : i32, i32
  }
  func.func @transform_2(%arg0: i32, %arg1: i32) -> (i32, i32) {
    %c0_i32 = arith.constant 0 : i32
    %c0_i32_0 = arith.constant 0 : i32
    %c0_i32_1 = arith.constant 0 : i32
    return %c0_i32, %c0_i32_0 : i32, i32
  }
  func.func @transform_3(%arg0: i32, %arg1: i32) -> (i32, i32, i32) {
    %c0_i32 = arith.constant 0 : i32
    %c0_i32_0 = arith.constant 0 : i32
    return %arg0, %arg1, %c0_i32 : i32, i32, i32
  }
}

</mosaic_0001>

<llo_original>
// kernel: tpu_custom_call.1
$region0: #{tpu_custom_call.1}
  #allocation0 [shape = 'u32[]', space=smem, size = 0x4, offset = 0x4, fixed_abs, tag = 'smem constant byte address 0x4 - core index']
  #allocation1 [shape = 'u32[144,128]{1,0:T(1,128)}', space=vmem, size = 0x12000, scoped, tag = 'internal scratch']
  %s0 = inlined_call_operand.hbm [shape: f32[2,16,128], index: 0, kind: input, shape index: {}]
  %s1 = inlined_call_operand.hbm [shape: bf16[128,256], index: 1, kind: input, shape index: {}]
  %s2 = inlined_call_operand.vmem [shape: f32[1,256], index: 2, kind: input, shape index: {}]
  %s3 = inlined_call_operand.hbm [shape: f32[2,16,256], index: 3, kind: output, shape index: {}]
  %s4 = sld [smem:[#allocation0]]
  $region53: #{tpu_custom_call.1} parent=0
    _
  %s6 = ssub.s32 1, %s4
  %s7 = scalar_select 0, %s6, %s4
  $region1: #{tpu_custom_call.1} parent=0
    #allocation2 [shape = 'u8[8192]{0}', space=vmem, size = 0x2000, scoped, tag = 'input window, operand 0']
    #allocation3 [shape = 's32[2]{0}', space=sflag, size = 0x8, scoped, tag = 'scoped memory for tpu_custom_call.1']
    #allocation4 [shape = 's32[2]{0}', space=sflag, size = 0x8, scoped, tag = 'scoped memory for tpu_custom_call.1']
    #allocation5 [shape = 'u8[65536]{0}', space=vmem, size = 0x10000, scoped, tag = 'input window, operand 1, single buffered']
    #allocation6 [shape = 's32[1]{0}', space=sflag, size = 0x4, scoped, tag = 'scoped memory for tpu_custom_call.1']
    #allocation7 [shape = 'u8[16384]{0}', space=vmem, size = 0x4000, scoped, tag = 'output window, operand 0']
    %8 = vsyncpa [#allocation3], 0
    %s9 = scalar_lea.sflag [#allocation3], 1
    %10 = vsyncpa %s9, 0
    %11 = vsyncpa [#allocation6], 0
    %12 = vsyncpa [#allocation4], 0
    %s13 = scalar_lea.sflag [#allocation4], 1
    %14 = vsyncpa %s13, 0
    loop: start=0, step=1, limit=6
    $region2: #{tpu_custom_call.1} parent=1 // loop_pre_header
      _
    $region3: #{tpu_custom_call.1} parent=1 // loop_header
      %s16 = sphi 0, %s20
      %p17 = scmp.ge.s32.totalorder %s16, 6
      %s23 = sphi 0, %s35
      %s24 = sphi 0, %s31
      %s25 = sphi 0, %s23
      %s26 = sphi 0, %s24
      %s27 = sphi 0, %s25
      %s28 = sphi 0, %s26
      %s40 = sphi 0, %s42
      %s43 = sphi 0, %s40
      %s44 = sphi 0, %s43
      %s60 = sphi 0, %s44
      %s64 = sphi 0, %s64
      %s66 = sphi 0, %s64
      %s67 = sphi 0, %s66
      %s81 = sphi 0, %s67
      %s85 = sphi 0, %s85
      %s87 = sphi 0, %s85
      %s88 = sphi 0, %s87
      %s102 = sphi 0, %s88
      %s110 = sphi 0, %s112
      %s113 = sphi 0, %s110
      %s114 = sphi 0, %s113
      %s130 = sphi 0, %s114
    $region4: #{tpu_custom_call.1} parent=1 // loop_header_branch
      %19 = sbr.rel (%p17) target = $region8
    $region5: #{tpu_custom_call.1} parent=1 // loop_body
      %s21 = ssub.s32 %s16, 1
      %s22 = ssub.s32 %s16, 2
      %s29 = sadd.s32 1, %s24
      %p30 = scmp.ge.s32.totalorder %s29, 2
      %s31 = scalar_select %p30, 0, %s29
      %s32 = sadd.s32 1, %s23
      %s33 = scalar_select %p30, %s32, %s23
      %p34 = scmp.ge.s32.totalorder %s33, 2
      %s35 = scalar_select %p34, 0, %s33
      %s36 = ssub.s32 %s23, %s35
      %s37 = ssub.s32 %s24, %s31
      %s38 = sor.u32 %s36, %s37
      %p39 = scmp.eq.s32.totalorder %s38, 0
      %s41 = sadd.s32 %s40, 1
      %s42 = scalar_select %p39, %s40, %s41
      %p45 = pneg %p39
      %p46 = scmp.eq.s32.totalorder %s16, 3
      %p47 = por %p45, %p46
      %p48 = scmp.ne.s32.totalorder %s40, %s43
      %p49 = scmp.eq.s32.totalorder %s16, 0
      %p50 = por %p48, %p49
      %p51 = scmp.ne.s32.totalorder %s40, %s43
      %p52 = scmp.eq.s32.totalorder %s21, 3
      %p53 = por %p51, %p52
      %p54 = scmp.ne.s32.totalorder %s43, %s44
      %p55 = scmp.eq.s32.totalorder %s21, 0
      %p56 = por %p54, %p55
      %p57 = scmp.ne.s32.totalorder %s43, %s44
      %p58 = scmp.eq.s32.totalorder %s22, 3
      %p59 = por %p57, %p58
      %p61 = scmp.ne.s32.totalorder %s44, %s60
      %p62 = scmp.eq.s32.totalorder %s22, 0
      %p63 = por %p61, %p62
      %s65 = sadd.s32 %s64, 1
      %p68 = scmp.eq.s32.totalorder %s16, 3
      %p69 = scmp.ne.s32.totalorder %s64, %s66
      %p70 = scmp.eq.s32.totalorder %s16, 0
      %p71 = por %p69, %p70
      %p72 = scmp.ne.s32.totalorder %s64, %s66
      %p73 = scmp.eq.s32.totalorder %s21, 3
      %p74 = por %p72, %p73
      %p75 = scmp.ne.s32.totalorder %s66, %s67
      %p76 = scmp.eq.s32.totalorder %s21, 0
      %p77 = por %p75, %p76
      %p78 = scmp.ne.s32.totalorder %s66, %s67
      %p79 = scmp.eq.s32.totalorder %s22, 3
      %p80 = por %p78, %p79
      %p82 = scmp.ne.s32.totalorder %s67, %s81
      %p83 = scmp.eq.s32.totalorder %s22, 0
      %p84 = por %p82, %p83
      %s86 = sadd.s32 %s85, 1
      %p89 = scmp.eq.s32.totalorder %s16, 3
      %p90 = scmp.ne.s32.totalorder %s85, %s87
      %p91 = scmp.eq.s32.totalorder %s16, 0
      %p92 = por %p90, %p91
      %p93 = scmp.ne.s32.totalorder %s85, %s87
      %p94 = scmp.eq.s32.totalorder %s21, 3
      %p95 = por %p93, %p94
      %p96 = scmp.ne.s32.totalorder %s87, %s88
      %p97 = scmp.eq.s32.totalorder %s21, 0
      %p98 = por %p96, %p97
      %p99 = scmp.ne.s32.totalorder %s87, %s88
      %p100 = scmp.eq.s32.totalorder %s22, 3
      %p101 = por %p99, %p100
      %p103 = scmp.ne.s32.totalorder %s88, %s102
      %p104 = scmp.eq.s32.totalorder %s22, 0
      %p105 = por %p103, %p104
      %s106 = ssub.s32 %s23, %s35
      %s107 = ssub.s32 %s24, %s31
      %s108 = sor.u32 %s106, %s107
      %p109 = scmp.eq.s32.totalorder %s108, 0
      %s111 = sadd.s32 %s110, 1
      %s112 = scalar_select %p109, %s110, %s111
      %p115 = pneg %p109
      %p116 = scmp.eq.s32.totalorder %s16, 3
      %p117 = por %p115, %p116
      %p118 = scmp.ne.s32.totalorder %s110, %s113
      %p119 = scmp.eq.s32.totalorder %s16, 0
      %p120 = por %p118, %p119
      %p121 = scmp.ne.s32.totalorder %s110, %s113
      %p122 = scmp.eq.s32.totalorder %s21, 3
      %p123 = por %p121, %p122
      %p124 = scmp.ne.s32.totalorder %s113, %s114
      %p125 = scmp.eq.s32.totalorder %s21, 0
      %p126 = por %p124, %p125
      %p127 = scmp.ne.s32.totalorder %s113, %s114
      %p128 = scmp.eq.s32.totalorder %s22, 3
      %p129 = por %p127, %p128
      %p131 = scmp.ne.s32.totalorder %s114, %s130
      %p132 = scmp.eq.s32.totalorder %s22, 0
      %p133 = por %p131, %p132
      %p134 = scmp.le.s32.totalorder 1, %s16
      %p135 = scmp.lt.s32.totalorder %s16, 5
      %p136 = pnand %p134, %p135
      %p137 = pneg %p136
      // Predicated region
      $region9: #{tpu_custom_call.1} parent=5 // pred_check
        _
      $region10: #{tpu_custom_call.1} parent=5 // pred_check_branch
        %139 = sbr.rel (%p136) target = $region12
      $region11: #{tpu_custom_call.1} parent=5 // pred_region
        %s140 = ssub.s32 %s16, 1
        // Predicated region
        $region13: #{tpu_custom_call.1} parent=11 // pred_check
          %p141 = pneg %p77
        $region14: #{tpu_custom_call.1} parent=11 // pred_check_branch
          %143 = sbr.rel (%p141) target = $region16
        $region15: #{tpu_custom_call.1} parent=11 // pred_region
          %s145 = ssub.s32 2048, 2048
          %146 = vsyncadd [#allocation6], %s145
          %s147 = sshll.u32 [#allocation5], 4
          %s148 = int_to_ptr.vmem [resolvable:$true] %s147
          %153 = dma.hbm_to_vmem [thread:$0]  %s1, 2048, %s148, [#allocation6], 128, 128, 8
        $region16: #{tpu_custom_call.1} parent=11 // pred_fallthru
          _
        // Predicated region
        $region17: #{tpu_custom_call.1} parent=11 // pred_check
          %p154 = pneg %p98
        $region18: #{tpu_custom_call.1} parent=11 // pred_check_branch
          %156 = sbr.rel (%p154) target = $region20
        $region19: #{tpu_custom_call.1} parent=11 // pred_region
          _
        $region20: #{tpu_custom_call.1} parent=11 // pred_fallthru
          _
      $region12: #{tpu_custom_call.1} parent=5 // pred_fallthru
        _
      %p157 = scmp.lt.s32.totalorder %s16, 4
      // Predicated region
      $region21: #{tpu_custom_call.1} parent=5 // pred_check
        %p158 = pneg %p157
      $region22: #{tpu_custom_call.1} parent=5 // pred_check_branch
        %160 = sbr.rel (%p158) target = $region24
      $region23: #{tpu_custom_call.1} parent=5 // pred_region
        // Predicated region
        $region25: #{tpu_custom_call.1} parent=23 // pred_check
          %p161 = pneg %p50
        $region26: #{tpu_custom_call.1} parent=23 // pred_check_branch
          %163 = sbr.rel (%p161) target = $region28
        $region27: #{tpu_custom_call.1} parent=23 // pred_region
          %s164 = sand.u32 %s40, 1
          %s165 = scalar_lea.sflag [#allocation3], %s164
          %s166 = sand.u32 %s40, 1
          %s167 = smul.addr %s166, 8
          %s168 = scalar_lea.vmem [#allocation2], %s167
          %s170 = ssub.s32 128, 128
          %171 = vsyncadd %s165, %s170
          %s172 = smul.addr %s23, 2
          %s173 = sadd.s32 %s24, %s172
          %s174 = smul.addr %s173, 128
          %s175 = scalar_lea.hbm %s0, %s174
          %s177 = sshll.u32 %s168, 4
          %s178 = int_to_ptr.vmem [resolvable:$true] %s177
          %180 = dma.hbm_to_vmem [thread:$0]  %s175, 128, %s178, %s165
        $region28: #{tpu_custom_call.1} parent=23 // pred_fallthru
          _
      $region24: #{tpu_custom_call.1} parent=5 // pred_fallthru
        _
      %p181 = scmp.le.s32.totalorder 1, %s16
      %p182 = scmp.lt.s32.totalorder %s16, 5
      %p183 = pnand %p181, %p182
      %p184 = pneg %p183
      // Predicated region
      $region29: #{tpu_custom_call.1} parent=5 // pred_check
        _
      $region30: #{tpu_custom_call.1} parent=5 // pred_check_branch
        %186 = sbr.rel (%p183) target = $region32
      $region31: #{tpu_custom_call.1} parent=5 // pred_region
        %s187 = ssub.s32 %s16, 1
        %s188 = sand.u32 %s43, 1
        %s189 = scalar_lea.sflag [#allocation3], %s188
        %s190 = sand.u32 %s43, 1
        %s191 = smul.addr %s190, 8
        %s192 = scalar_lea.vmem [#allocation2], %s191
        // Predicated region
        $region33: #{tpu_custom_call.1} parent=31 // pred_check
          %p193 = pneg %p56
        $region34: #{tpu_custom_call.1} parent=31 // pred_check_branch
          %195 = sbr.rel (%p193) target = $region36
        $region35: #{tpu_custom_call.1} parent=31 // pred_region
          %196 = dma.done %s189, 128
        $region36: #{tpu_custom_call.1} parent=31 // pred_fallthru
          _
        // Predicated region
        $region37: #{tpu_custom_call.1} parent=31 // pred_check
          %p197 = pneg %p77
        $region38: #{tpu_custom_call.1} parent=31 // pred_check_branch
          %199 = sbr.rel (%p197) target = $region40
        $region39: #{tpu_custom_call.1} parent=31 // pred_region
          %200 = dma.done [#allocation6], 2048
        $region40: #{tpu_custom_call.1} parent=31 // pred_fallthru
          _
        %s201 = sand.u32 %s43, 1
        %s202 = scalar_lea.sflag [#allocation3], %s201
        %s203 = sand.u32 %s43, 1
        %s204 = smul.addr %s203, 8
        %s205 = scalar_lea.vmem [#allocation2], %s204
        %p206 = pneg %p56
        %p207 = pneg %p53
        %p208 = pneg %p77
        %p209 = pneg %p74
        %p210 = pneg %p98
        %p211 = pneg %p95
        %p212 = pneg %p126
        %p213 = pneg %p123
        %s214 = sand.u32 %s113, 1
        %s215 = scalar_lea.sflag [#allocation4], %s214
        %s216 = sand.u32 %s113, 1
        %s217 = smul.addr %s216, 16
        %s218 = scalar_lea.vmem [#allocation7], %s217
        %v220 = vld [vmem:[%s192] sm:$0xff]
        %v221 = vpack.c.bf16 %v220, %v220
        %v222 = vld [vmem:[#allocation5] sm:$0xff]
        %v223 = vld [vmem:[#allocation5 + $0x8] sm:$0xff]
        %v224 = vld [vmem:[#allocation5 + $0x10] sm:$0xff]
        %v225 = vld [vmem:[#allocation5 + $0x18] sm:$0xff]
        %v226 = vld [vmem:[#allocation5 + $0x20] sm:$0xff]
        %v227 = vld [vmem:[#allocation5 + $0x28] sm:$0xff]
        %v228 = vld [vmem:[#allocation5 + $0x30] sm:$0xff]
        %v229 = vld [vmem:[#allocation5 + $0x38] sm:$0xff]
        %v230 = vld [vmem:[#allocation5 + $0x40] sm:$0xff]
        %v231 = vld [vmem:[#allocation5 + $0x48] sm:$0xff]
        %v232 = vld [vmem:[#allocation5 + $0x50] sm:$0xff]
        %v233 = vld [vmem:[#allocation5 + $0x58] sm:$0xff]
        %v234 = vld [vmem:[#allocation5 + $0x60] sm:$0xff]
        %v235 = vld [vmem:[#allocation5 + $0x68] sm:$0xff]
        %v236 = vld [vmem:[#allocation5 + $0x70] sm:$0xff]
        %v237 = vld [vmem:[#allocation5 + $0x78] sm:$0xff]
        %v238 = vld [vmem:[%s2] sm:$0x3]
        %v240 = vlaneseq
        %v241 = vshrl.u32 %v240, 7
        %v242 = vsub.s32 0, %v241
        %v243 = vrot.slane %v238, %v242
        %v244 = vlaneseq
        %v245 = vshrl.u32 %v244, 7
        %v246 = vsub.s32 1, %v245
        %v247 = vrot.slane %v238, %v246
        %v266 = vunpack.c.l.b16 %v222
        %v267 = vunpack.c.h.b16 %v222
        %v268 = vunpack.c.l.b16 %v223
        %v269 = vunpack.c.h.b16 %v223
        %v270 = vunpack.c.l.b16 %v224
        %v271 = vunpack.c.h.b16 %v224
        %v272 = vunpack.c.l.b16 %v225
        %v273 = vunpack.c.h.b16 %v225
        %v274 = vunpack.c.l.b16 %v226
        %v275 = vunpack.c.h.b16 %v226
        %v276 = vunpack.c.l.b16 %v227
        %v277 = vunpack.c.h.b16 %v227
        %v278 = vunpack.c.l.b16 %v228
        %v279 = vunpack.c.h.b16 %v228
        %v280 = vunpack.c.l.b16 %v229
        %v281 = vunpack.c.h.b16 %v229
        %v282 = vunpack.c.l.b16 %v230
        %v283 = vunpack.c.h.b16 %v230
        %v284 = vunpack.c.l.b16 %v231
        %v285 = vunpack.c.h.b16 %v231
        %v286 = vunpack.c.l.b16 %v232
        %v287 = vunpack.c.h.b16 %v232
        %v288 = vunpack.c.l.b16 %v233
        %v289 = vunpack.c.h.b16 %v233
        %v290 = vunpack.c.l.b16 %v234
        %v291 = vunpack.c.h.b16 %v234
        %v292 = vunpack.c.l.b16 %v235
        %v293 = vunpack.c.h.b16 %v235
        %v294 = vunpack.c.l.b16 %v236
        %v295 = vunpack.c.h.b16 %v236
        %v296 = vunpack.c.l.b16 %v237
        %v297 = vunpack.c.h.b16 %v237
        %v298 = vpack.c.b16 %v268, %v266
        %v299 = vpack.c.b16 %v269, %v267
        %v300 = vpack.c.b16 %v272, %v270
        %v301 = vpack.c.b16 %v273, %v271
        %v302 = vpack.c.b16 %v276, %v274
        %v303 = vpack.c.b16 %v277, %v275
        %v304 = vpack.c.b16 %v280, %v278
        %v305 = vpack.c.b16 %v281, %v279
        %v306 = vpack.c.b16 %v284, %v282
        %v307 = vpack.c.b16 %v285, %v283
        %v308 = vpack.c.b16 %v288, %v286
        %v309 = vpack.c.b16 %v289, %v287
        %v310 = vpack.c.b16 %v292, %v290
        %v311 = vpack.c.b16 %v293, %v291
        %v312 = vpack.c.b16 %v296, %v294
        %v313 = vpack.c.b16 %v297, %v295
        %330 = vmatprep.subr.bf16.mxu0 %v299
        %331 = vmatpush1.bf16.msra.mxu0 %v298
        %332 = vmatprep.subr.bf16.mxu0 %v301
        %333 = vmatpush1.bf16.msra.mxu0 %v300
        %334 = vmatprep.subr.bf16.mxu0 %v303
        %335 = vmatpush1.bf16.msra.mxu0 %v302
        %336 = vmatprep.subr.bf16.mxu0 %v305
        %337 = vmatpush1.bf16.msra.mxu0 %v304
        %338 = vmatprep.subr.bf16.mxu0 %v307
        %339 = vmatpush1.bf16.msra.mxu0 %v306
        %340 = vmatprep.subr.bf16.mxu0 %v309
        %341 = vmatpush1.bf16.msra.mxu0 %v308
        %342 = vmatprep.subr.bf16.mxu0 %v311
        %343 = vmatpush1.bf16.msra.mxu0 %v310
        %344 = vmatprep.subr.bf16.mxu0 %v313
        %345 = vmatpush1.bf16.msra.mxu0 %v312
        %346 = vmatprep.subr.bf16.mxu0 0
        %347 = vmatpush1.bf16.msra.mxu0 0
        %348 = vmatprep.subr.bf16.mxu0 0
        %349 = vmatpush1.bf16.msra.mxu0 0
        %350 = vmatprep.subr.bf16.mxu0 0
        %351 = vmatpush1.bf16.msra.mxu0 0
        %352 = vmatprep.subr.bf16.mxu0 0
        %353 = vmatpush1.bf16.msra.mxu0 0
        %354 = vmatprep.subr.bf16.mxu0 0
        %355 = vmatpush1.bf16.msra.mxu0 0
        %356 = vmatprep.subr.bf16.mxu0 0
        %357 = vmatpush1.bf16.msra.mxu0 0
        %358 = vmatprep.subr.bf16.mxu0 0
        %359 = vmatpush1.bf16.msra.mxu0 0
        %360 = vmatprep.subr.bf16.mxu0 0
        %361 = vmatpush1.bf16.msra.mxu0 0
        %362 = vmatprep.mubr.bf16.mxu0 0
        %363 = vmatmul.mubr.bf16.gmra.mrb[0].mxu0 %v221
        %v364 = vpop.f32.mrb[0].mxu0
        %v365 = vadd.f32 %v243, %v364
        %v366 = vpop.f32.mrb[0].mxu0
        %v367 = vadd.f32 %v247, %v366
        %v368 = vpop.f32.mrb[0].mxu0
        %v369 = vpop.f32.mrb[0].mxu0
        %370 = vdwg.mxu0
        %v371 = vcombine.high %v365, 0.0
        %v373 = vunpack.c.l.s4 1983009808
        %v374 = vunpack.c.0.s8 %v373
        %v375 = vlaneseq
        %v376 = vshrl.u32 %v375, 7
        %v377 = vsub.s32 %v374, %v376
        %v378 = vrot.slane %v365, %v377
        %v380 = vunpack.c.l.s4 1983009808
        %v381 = vunpack.c.0.s8 %v380
        %v382 = vlaneseq
        %v383 = vshrl.u32 %v382, 7
        %v384 = vsub.s32 %v381, %v383
        %v385 = vrot.slane %v371, %v384
        %v386 = vcombine.high %v367, 0.0
        %v388 = vunpack.c.l.s4 1983009808
        %v389 = vunpack.c.0.s8 %v388
        %v390 = vlaneseq
        %v391 = vshrl.u32 %v390, 7
        %v392 = vsub.s32 %v389, %v391
        %v393 = vrot.slane %v367, %v392
        %v395 = vunpack.c.l.s4 1983009808
        %v396 = vunpack.c.0.s8 %v395
        %v397 = vlaneseq
        %v398 = vshrl.u32 %v397, 7
        %v399 = vsub.s32 %v396, %v398
        %v400 = vrot.slane %v386, %v399
        %v401 = vcombine.low %v378, %v393
        %v402 = vcombine.high %v378, %v393
        %v404 = vunpack.c.l.s4 1934713408
        %v405 = vunpack.c.0.s8 %v404
        %v406 = vlaneseq
        %v407 = vshrl.u32 %v406, 7
        %v408 = vsub.s32 %v405, %v407
        %v409 = vrot.slane %v401, %v408
        %v411 = vunpack.c.l.s4 1934713408
        %v412 = vunpack.c.0.s8 %v411
        %v413 = vlaneseq
        %v414 = vshrl.u32 %v413, 7
        %v415 = vsub.s32 %v412, %v414
        %v416 = vrot.slane %v402, %v415
        %v417 = vcombine.low %v385, %v400
        %v418 = vcombine.high %v385, %v400
        %v420 = vunpack.c.l.s4 1934713408
        %v421 = vunpack.c.0.s8 %v420
        %v422 = vlaneseq
        %v423 = vshrl.u32 %v422, 7
        %v424 = vsub.s32 %v421, %v423
        %v425 = vrot.slane %v417, %v424
        %v427 = vunpack.c.l.s4 1934713408
        %v428 = vunpack.c.0.s8 %v427
        %v429 = vlaneseq
        %v430 = vshrl.u32 %v429, 7
        %v431 = vsub.s32 %v428, %v430
        %v432 = vrot.slane %v418, %v431
        %v433 = vcombine.high %v409, 0.0
        %v434 = vcombine.low %v409, %v433
        %v436 = vunpack.c.l.s4 1934713408
        %v437 = vunpack.c.0.s8 %v436
        %v438 = vlaneseq
        %v439 = vshrl.u32 %v438, 7
        %v440 = vsub.s32 %v437, %v439
        %v441 = vrot.slane %v434, %v440
        %v442 = vcombine.high %v441, 0.0
        %v443 = vcombine.high %v416, 0.0
        %v444 = vcombine.low %v416, %v443
        %v446 = vunpack.c.l.s4 1934713408
        %v447 = vunpack.c.0.s8 %v446
        %v448 = vlaneseq
        %v449 = vshrl.u32 %v448, 7
        %v450 = vsub.s32 %v447, %v449
        %v451 = vrot.slane %v444, %v450
        %v452 = vcombine.high %v451, 0.0
        %v453 = vcombine.high %v425, 0.0
        %v454 = vcombine.low %v425, %v453
        %v456 = vunpack.c.l.s4 1934713408
        %v457 = vunpack.c.0.s8 %v456
        %v458 = vlaneseq
        %v459 = vshrl.u32 %v458, 7
        %v460 = vsub.s32 %v457, %v459
        %v461 = vrot.slane %v454, %v460
        %v462 = vcombine.high %v461, 0.0
        %v463 = vcombine.high %v432, 0.0
        %v464 = vcombine.low %v432, %v463
        %v466 = vunpack.c.l.s4 1934713408
        %v467 = vunpack.c.0.s8 %v466
        %v468 = vlaneseq
        %v469 = vshrl.u32 %v468, 7
        %v470 = vsub.s32 %v467, %v469
        %v471 = vrot.slane %v464, %v470
        %v472 = vcombine.high %v471, 0.0
        %v473 = vcombine.low %v441, %v451
        %v475 = vunpack.c.l.s4 1983009808
        %v476 = vunpack.c.0.s8 %v475
        %v477 = vlaneseq
        %v478 = vshrl.u32 %v477, 7
        %v479 = vsub.s32 %v476, %v478
        %v480 = vrot.slane %v473, %v479
        %v481 = vcombine.low %v442, %v452
        %v483 = vunpack.c.l.s4 1983009808
        %v484 = vunpack.c.0.s8 %v483
        %v485 = vlaneseq
        %v486 = vshrl.u32 %v485, 7
        %v487 = vsub.s32 %v484, %v486
        %v488 = vrot.slane %v481, %v487
        %v489 = vcombine.low %v461, %v471
        %v491 = vunpack.c.l.s4 1983009808
        %v492 = vunpack.c.0.s8 %v491
        %v493 = vlaneseq
        %v494 = vshrl.u32 %v493, 7
        %v495 = vsub.s32 %v492, %v494
        %v496 = vrot.slane %v489, %v495
        %v497 = vcombine.low %v462, %v472
        %v499 = vunpack.c.l.s4 1983009808
        %v500 = vunpack.c.0.s8 %v499
        %v501 = vlaneseq
        %v502 = vshrl.u32 %v501, 7
        %v503 = vsub.s32 %v500, %v502
        %v504 = vrot.slane %v497, %v503
        %v505 = vcombine.low %v480, %v488
        %v507 = vunpack.c.l.s4 1934713408
        %v508 = vunpack.c.0.s8 %v507
        %v509 = vlaneseq
        %v510 = vshrl.u32 %v509, 7
        %v511 = vsub.s32 %v508, %v510
        %v512 = vrot.slane %v505, %v511
        %v513 = vcombine.low %v496, %v504
        %v515 = vunpack.c.l.s4 1934713408
        %v516 = vunpack.c.0.s8 %v515
        %v517 = vlaneseq
        %v518 = vshrl.u32 %v517, 7
        %v519 = vsub.s32 %v516, %v518
        %v520 = vrot.slane %v513, %v519
        %v521 = vcombine.low %v512, %v520
        %v522 = vcombine.high %v512, %v520
        %523 = vst [vmem:[%s218] sm:$0xff] %v521
        %524 = vst [vmem:[%s218 + $0x8] sm:$0xff] %v522
        %s525 = sand.u32 %s113, 1
        %s526 = scalar_lea.sflag [#allocation4], %s525
        %s527 = sand.u32 %s113, 1
        %s528 = smul.addr %s527, 16
        %s529 = scalar_lea.vmem [#allocation7], %s528
        // Predicated region
        $region41: #{tpu_custom_call.1} parent=31 // pred_check
          %p530 = pneg %p123
        $region42: #{tpu_custom_call.1} parent=31 // pred_check_branch
          %532 = sbr.rel (%p530) target = $region44
        $region43: #{tpu_custom_call.1} parent=31 // pred_region
          %s534 = ssub.s32 256, 256
          %535 = vsyncadd %s526, %s534
          %s536 = smul.addr %s26, 2
          %s537 = smul.addr %s25, 4
          %s538 = sadd.s32 %s536, %s537
          %s539 = smul.addr %s538, 128
          %s540 = scalar_lea.hbm %s3, %s539
          %s542 = sshll.u32 %s529, 4
          %s543 = int_to_ptr.vmem [resolvable:$true] %s542
          %545 = dma.vmem_to_hbm [thread:$0]  %s543, 256, %s540, %s526
        $region44: #{tpu_custom_call.1} parent=31 // pred_fallthru
          _
      $region32: #{tpu_custom_call.1} parent=5 // pred_fallthru
        _
      %p546 = scmp.le.s32.totalorder 2, %s16
      // Predicated region
      $region45: #{tpu_custom_call.1} parent=5 // pred_check
        %p547 = pneg %p546
      $region46: #{tpu_custom_call.1} parent=5 // pred_check_branch
        %549 = sbr.rel (%p547) target = $region48
      $region47: #{tpu_custom_call.1} parent=5 // pred_region
        %s550 = ssub.s32 %s16, 2
        // Predicated region
        $region49: #{tpu_custom_call.1} parent=47 // pred_check
          %p551 = pneg %p129
        $region50: #{tpu_custom_call.1} parent=47 // pred_check_branch
          %553 = sbr.rel (%p551) target = $region52
        $region51: #{tpu_custom_call.1} parent=47 // pred_region
          %s554 = sand.u32 %s114, 1
          %s555 = scalar_lea.sflag [#allocation4], %s554
          %s556 = sand.u32 %s114, 1
          %s557 = smul.addr %s556, 16
          %s558 = scalar_lea.vmem [#allocation7], %s557
          %559 = dma.done %s555, 256
        $region52: #{tpu_custom_call.1} parent=47 // pred_fallthru
          _
      $region48: #{tpu_custom_call.1} parent=5 // pred_fallthru
        _
    $region6: #{tpu_custom_call.1} parent=1 // loop_footer
      %s20 = sadd.s32 1, %s16
    $region7: #{tpu_custom_call.1} parent=1 // loop_footer_branch
      %15 = sbr.rel target = $region3
    $region8: #{tpu_custom_call.1} parent=1 // loop_exit
      _
    %560 = vsyncpa [#allocation3], 1
    %s561 = scalar_lea.sflag [#allocation3], 1
    %562 = vsyncpa %s561, 1
    %563 = vsyncpa [#allocation6], 1
    %564 = vsyncpa [#allocation4], 1
    %s565 = scalar_lea.sflag [#allocation4], 1
    %566 = vsyncpa %s565, 1

</llo_original>
